<compile_context>
chip_gen: v7x
topology: tpu7x:2x2x1
jax: 0.10.0
libtpu: 0.0.40
codegen_flags: <defaults>
</compile_context>

<pallas_src>
import jax
import jax.numpy as jnp
from jax.experimental import pallas as pl
from jax.experimental.pallas import tpu as pltpu

LANE = 128
_NEG = -3.0e38  # max-pool sentinel (assumes every graph has >= 1 node, as in PyG)


# -----------------------------------------------------------------------------
# Small helpers: padding, generation-aware tile / VMEM-limit selection
# -----------------------------------------------------------------------------
def _ceil_to(n, m):
    return ((n + m - 1) // m) * m


def _pad_last(a, mult=LANE):
    pad = (-a.shape[-1]) % mult
    if pad == 0:
        return a
    cfg = [(0, 0)] * (a.ndim - 1) + [(0, pad)]
    return jnp.pad(a, cfg)


def _pad_rows(a, rows):
    pad = rows - a.shape[0]
    return jnp.pad(a, ((0, pad), (0, 0))) if pad else a


def _tpu_vmem_bytes():
    try:
        cap = int(getattr(pltpu.get_tpu_info(), "vmem_capacity_bytes", 0))
        if cap >= (16 << 20):
            return cap
    except Exception:
        pass
    return 64 << 20  # conservative (v7x per-TC); v5e/v6e have 128 MiB


def _agg_vmem_bytes(tm, n_pad, s, fp):
    """Worst-case VMEM working set of the two aggregation kernels."""
    a_buf = 2 * tm * n_pad * 2            # A row-tile double buffer (bf16)
    y_res = 2 * s * n_pad * fp * 2        # resident Y (allow for double buffer)
    out_fused = 2 * s * tm * fp * 2       # fused layer-1 output (S,TM,Fp) bf16
    acc = tm * fp * 4                     # f32 accumulator scratch (layer 1)
    w2 = 2 * s * fp * fp * 2              # resident W2 (bf16)
    out_final = 2 * tm * fp * 4           # layer-2 output (TM,Fp) f32
    misc = 4 * fp * 4 + (64 << 10)
    return a_buf + y_res + max(out_fused + acc + w2, out_final) + misc


def _choose_tiles(n, s, fp, vmem_cap):
    """Row tile TM and padded node count.  TM never falls back to N; N is
    always padded to (at least) a multiple of 128 so every block is lane-dense
    and bf16 sublane packing is clean."""
    budget = int(vmem_cap * 0.75)
    n_min = _ceil_to(n, LANE)
    tm, n_pad = LANE, n_min
    for cand in (1024, 512, 256, 128):
        cand_pad = _ceil_to(n, cand)
        # don't blow up A (S*N^2 bytes) by more than ~12.5% just for a bigger tile
        if cand_pad * cand_pad > (n_min * n_min) * 9 // 8:
            continue
        if _agg_vmem_bytes(cand, cand_pad, s, fp) <= budget:
            tm, n_pad = cand, cand_pad
            break
    # TODO(synk): for very large N (resident Y + A double-buffer > VMEM budget)
    # the contraction dim itself would need tiling / Y spilled back to HBM.
    return tm, n_pad, _agg_vmem_bytes(tm, n_pad, s, fp)


# -----------------------------------------------------------------------------
# Kernel 1: layer-1 feature mix   Y1[s] = x @ W1_s   (one x DMA per row tile)
# -----------------------------------------------------------------------------
def _mix_kernel(x_ref, w_ref, y_ref):
    x = x_ref[...]                                  # (TM, Fin) f32
    for s in range(y_ref.shape[0]):                 # static S
        y_ref[s] = jnp.dot(x, w_ref[s],
                           preferred_element_type=jnp.float32).astype(y_ref.dtype)


def _mix(x, w, tm):
    """x: (N, Fin) f32, w: (S, Fin, Fp) f32 -> Y: (S, N, Fp) bf16."""
    n, fin = x.shape
    s, _, fp = w.shape
    return pl.pallas_call(
        _mix_kernel,
        out_shape=jax.ShapeDtypeStruct((s, n, fp), jnp.bfloat16),
        grid_spec=pltpu.PrefetchScalarGridSpec(
            num_scalar_prefetch=0,
            grid=(n // tm,),
            in_specs=[
                pl.BlockSpec((tm, fin), lambda i: (i, 0)),
                pl.BlockSpec((s, fin, fp), lambda i: (0, 0, 0)),
            ],
            out_specs=pl.BlockSpec((s, tm, fp), lambda i: (0, i, 0)),
        ),
        compiler_params=pltpu.CompilerParams(
            dimension_semantics=("parallel",)),
    )(x, w)


# -----------------------------------------------------------------------------
# Kernel 2: layer-1 aggregation fused with layer-2 mix
#   acc = sum_s A_s_tile @ Y1[s];  h = relu(acc + b1);  Y2[s2] = h @ W2_s2
#   grid = (row tiles, S); Y1 and W2 are VMEM-resident (constant index maps).
# -----------------------------------------------------------------------------
def _agg_fused_kernel(a_ref, y_ref, b_ref, w2_ref, o_ref, acc_ref):
    k = pl.program_id(1)

    @pl.when(k == 0)
    def _():
        acc_ref[...] = jnp.zeros_like(acc_ref)

    # (TM, N) bf16 @ (N, Fp) bf16 -> f32 accumulate (MXU-native)
    acc_ref[...] += jnp.dot(a_ref[...], y_ref[k],
                            preferred_element_type=jnp.float32)

    @pl.when(k == pl.num_programs(1) - 1)
    def _():
        h = jnp.maximum(acc_ref[...] + b_ref[...], 0.0).astype(jnp.bfloat16)
        for s2 in range(o_ref.shape[0]):            # static S: emit Y2 directly
            o_ref[s2] = jnp.dot(h, w2_ref[s2],
                                preferred_element_type=jnp.float32
                                ).astype(o_ref.dtype)


def _agg_fused(a16, y1, b1, w2_16, tm, vmem_limit):
    s, n_pad, _ = a16.shape
    fp = y1.shape[-1]
    cost = pl.CostEstimate(
        flops=2 * s * n_pad * n_pad * fp + 2 * s * n_pad * fp * fp,
        transcendentals=0,
        bytes_accessed=s * n_pad * n_pad * 2 + 2 * s * n_pad * fp * 2
                       + s * fp * fp * 2,
    )
    return pl.pallas_call(
        _agg_fused_kernel,
        out_shape=jax.ShapeDtypeStruct((s, n_pad, fp), jnp.bfloat16),
        grid_spec=pltpu.PrefetchScalarGridSpec(
            num_scalar_prefetch=0,
            grid=(n_pad // tm, s),
            in_specs=[
                pl.BlockSpec((pl.Squeezed(), tm, n_pad), lambda i, k: (k, i, 0)),
                pl.BlockSpec((s, n_pad, fp), lambda i, k: (0, 0, 0)),   # Y1 resident
                pl.BlockSpec((1, fp), lambda i, k: (0, 0)),
                pl.BlockSpec((s, fp, fp), lambda i, k: (0, 0, 0)),      # W2 resident
            ],
            out_specs=pl.BlockSpec((s, tm, fp), lambda i, k: (0, i, 0)),
            scratch_shapes=[pltpu.VMEM((tm, fp), jnp.float32)],
        ),
        compiler_params=pltpu.CompilerParams(
            dimension_semantics=("parallel", "arbitrary"),
            vmem_limit_bytes=vmem_limit),
        cost_estimate=cost,
    )(a16, y1, b1, w2_16)


# -----------------------------------------------------------------------------
# Kernel 3: layer-2 aggregation.  Accumulates directly into the resident f32
# output block (no scratch); bias + ReLU applied in place at the last support.
# -----------------------------------------------------------------------------
def _agg_final_kernel(a_ref, y_ref, b_ref, o_ref):
    k = pl.program_id(1)

    @pl.when(k == 0)
    def _():
        o_ref[...] = jnp.zeros_like(o_ref)

    o_ref[...] += jnp.dot(a_ref[...], y_ref[k],
                          preferred_element_type=jnp.float32)

    @pl.when(k == pl.num_programs(1) - 1)
    def _():
        o_ref[...] = jnp.maximum(o_ref[...] + b_ref[...], 0.0)


def _agg_final(a16, y2, b2, tm, vmem_limit):
    s, n_pad, _ = a16.shape
    fp = y2.shape[-1]
    cost = pl.CostEstimate(
        flops=2 * s * n_pad * n_pad * fp,
        transcendentals=0,
        bytes_accessed=s * n_pad * n_pad * 2 + s * n_pad * fp * 2 + n_pad * fp * 4,
    )
    return pl.pallas_call(
        _agg_final_kernel,
        out_shape=jax.ShapeDtypeStruct((n_pad, fp), jnp.float32),
        grid_spec=pltpu.PrefetchScalarGridSpec(
            num_scalar_prefetch=0,
            grid=(n_pad // tm, s),
            in_specs=[
                pl.BlockSpec((pl.Squeezed(), tm, n_pad), lambda i, k: (k, i, 0)),
                pl.BlockSpec((s, n_pad, fp), lambda i, k: (0, 0, 0)),   # Y2 resident
                pl.BlockSpec((1, fp), lambda i, k: (0, 0)),
            ],
            out_specs=pl.BlockSpec((tm, fp), lambda i, k: (i, 0)),
        ),
        compiler_params=pltpu.CompilerParams(
            dimension_semantics=("parallel", "arbitrary"),
            vmem_limit_bytes=vmem_limit),
        cost_estimate=cost,
    )(a16, y2, b2)


# -----------------------------------------------------------------------------
# Kernel 4: readout head, tiled over N.
#   Running (B, Fp) mean-sum (MXU, bf16 one-hot P) and per-graph running max
#   (VPU, masked by node->graph id, no (B, TN, Fp) broadcast) in VMEM scratch;
#   fc2 + log_softmax only at the last tile.
# -----------------------------------------------------------------------------
def _head_kernel(x_ref, p_ref, bid_ref, invc_ref, wm_ref, wx_ref, b_ref,
                 o_ref, sum_ref, max_ref):
    i = pl.program_id(0)

    @pl.when(i == 0)
    def _():
        sum_ref[...] = jnp.zeros_like(sum_ref)
        max_ref[...] = jnp.full_like(max_ref, _NEG)

    x = x_ref[...]                                        # (TN, Fp) f32
    # mean-pool numerator: bf16 one-hot P (exact 0/1) x bf16 features, f32 acc
    sum_ref[...] += jnp.dot(p_ref[...], x.astype(jnp.bfloat16),
                            preferred_element_type=jnp.float32)

    # running per-graph max; padded nodes carry an out-of-range graph id
    bid = bid_ref[...]                                    # (TN, 1) int32
    nb = sum_ref.shape[0]
    rows = jax.lax.broadcasted_iota(jnp.int32, (nb, 1), 0)

    @pl.loop(0, nb)
    def _(b):
        tile_max = jnp.max(jnp.where(bid == b, x, _NEG), axis=0, keepdims=True)
        cur = max_ref[...]
        max_ref[...] = jnp.where(rows == b, jnp.maximum(cur, tile_max), cur)

    @pl.when(i == pl.num_programs(0) - 1)
    def _():
        mean = sum_ref[...] * invc_ref[...]
        logits = (jnp.dot(mean, wm_ref[...], preferred_element_type=jnp.float32)
                  + jnp.dot(max_ref[...], wx_ref[...],
                            preferred_element_type=jnp.float32)
                  + b_ref[...])
        m = jnp.max(logits, axis=1, keepdims=True)
        lse = jnp.log(jnp.sum(jnp.exp(logits - m), axis=1, keepdims=True)) + m
        o_ref[...] = (logits - lse).astype(o_ref.dtype)


def _readout(x, p16, bid, inv_counts, w_mean, w_max, bfc, tn):
    n_pad, fp = x.shape
    bsz = p16.shape[0]
    c = w_mean.shape[1]
    return pl.pallas_call(
        _head_kernel,
        out_shape=jax.ShapeDtypeStruct((bsz, c), jnp.float32),
        grid_spec=pltpu.PrefetchScalarGridSpec(
            num_scalar_prefetch=0,
            grid=(n_pad // tn,),
            in_specs=[
                pl.BlockSpec((tn, fp), lambda i: (i, 0)),
                pl.BlockSpec((bsz, tn), lambda i: (0, i)),
                pl.BlockSpec((tn, 1), lambda i: (i, 0)),
                pl.BlockSpec((bsz, 1), lambda i: (0, 0)),
                pl.BlockSpec((fp, c), lambda i: (0, 0)),
                pl.BlockSpec((fp, c), lambda i: (0, 0)),
                pl.BlockSpec((1, c), lambda i: (0, 0)),
            ],
            out_specs=pl.BlockSpec((bsz, c), lambda i: (0, 0)),
            scratch_shapes=[pltpu.VMEM((bsz, fp), jnp.float32),
                            pltpu.VMEM((bsz, fp), jnp.float32)],
        ),
        compiler_params=pltpu.CompilerParams(
            dimension_semantics=("arbitrary",)),
    )(x, p16, bid, inv_counts, w_mean, w_max, bfc)


# -----------------------------------------------------------------------------
# GNNML3 forward (eval mode: dropout = identity)
# -----------------------------------------------------------------------------
def gnnml3_forward(params, x, A, batch, num_graphs):
    """x: (N, ninp) f32; A: (S, N, N) f32 dense spectral supports A[s, tgt, src];
    batch: (N,) int32 node->graph id; num_graphs: python int B."""
    s, n, _ = A.shape
    nout = params["W1"].shape[2]

    # pad feature dims to lane-dense 128 (padded columns stay exactly zero)
    w1 = _pad_last(params["W1"])                              # (S, ninp, Fp)
    fp = w1.shape[-1]
    b1 = _pad_last(params["b1"]).reshape(1, fp)
    w2 = _pad_last(params["W2"])                              # (S, nout, Fp)
    w2 = jnp.pad(w2, ((0, 0), (0, fp - w2.shape[1]), (0, 0)))  # (S, Fp, Fp)
    b2 = _pad_last(params["b2"]).reshape(1, fp)
    wfc = params["Wfc"]
    w_mean = _pad_rows(wfc[:nout], fp)                        # (Fp, C)
    w_max = _pad_rows(wfc[nout:], fp)                         # (Fp, C)
    bfc = params["bfc"].reshape(1, -1)

    # generation-aware row tile + node padding (N padded to a multiple of TM)
    cap = _tpu_vmem_bytes()
    tm, n_pad, need = _choose_tiles(n, s, fp, cap)
    vmem_limit = int(min(max(need * 1.2, 32 << 20), cap * 0.9))

    # TODO(synk): optionally quantize A to int8 (v5e/v6e) / fp8 (v7x) with a
    # per-support scale to halve the dominant A stream; gated on accuracy.
    a16 = jnp.pad(A, ((0, 0), (0, n_pad - n), (0, n_pad - n))).astype(jnp.bfloat16)
    xp = jnp.pad(x, ((0, n_pad - n), (0, 0)))
    bid = jnp.pad(batch.astype(jnp.int32), (0, n_pad - n),
                  constant_values=num_graphs).reshape(n_pad, 1)
    p = (bid[:, 0][None, :] == jnp.arange(num_graphs)[:, None])   # (B, n_pad)
    p16 = p.astype(jnp.bfloat16)
    counts = jnp.sum(p, axis=1, keepdims=True).astype(jnp.float32)
    inv_counts = 1.0 / counts
    w2_16 = w2.astype(jnp.bfloat16)

    # conv1 / conv2: ML3Layer(learnedge=False, nout2=0) == relu(SpectConv(x))
    y1 = _mix(xp, w1, tm)                                 # (S, Np, Fp) bf16
    y2 = _agg_fused(a16, y1, b1, w2_16, tm, vmem_limit)   # (S, Np, Fp) bf16 (=h1@W2)
    h2 = _agg_final(a16, y2, b2, tm, vmem_limit)          # (Np, Fp) f32
    # readout: [mean_pool, max_pool] -> fc2 -> log_softmax
    return _readout(h2, p16, bid, inv_counts, w_mean, w_max, bfc, tm)


if __name__ == "__main__":
    key = jax.random.PRNGKey(0)

    # Small shapes consistent with the module:
    #   ninp = dataset.num_features = 4, ne (supports) = 4,
    #   nout1 = 64, nout2 = 0 -> nin = 64, fc2: 128 -> 2
    N, B, S, NINP, NOUT, NCLS, E = 16, 2, 4, 4, 64, 2, 48
    keys = jax.random.split(key, 10)

    # synthetic graph data (edge_index2 / edge_attr2 analog)
    src = jax.random.randint(keys[0], (E,), 0, N)
    tgt = jax.random.randint(keys[1], (E,), 0, N)
    edge_attr = jax.random.uniform(keys[2], (E, S), dtype=jnp.float32)
    x = jax.random.normal(keys[3], (N, NINP), dtype=jnp.float32)

    # densify supports: A[s, target, source] = scatter-add of edge_attr[:, s]
    A = jnp.stack([
        jnp.zeros((N, N), jnp.float32).at[tgt, src].add(edge_attr[:, s])
        for s in range(S)
    ])

    # two graphs of 8 nodes each (data.batch analog)
    batch = jnp.concatenate([jnp.zeros(8, jnp.int32), jnp.ones(8, jnp.int32)])

    # deterministic parameter init (SpectConv weights+bias per layer, fc2)
    params = {
        "W1": 0.1 * jax.random.normal(keys[4], (S, NINP, NOUT), jnp.float32),
        "b1": 0.1 * jax.random.normal(keys[7], (NOUT,), jnp.float32),
        "W2": 0.1 * jax.random.normal(keys[5], (S, NOUT, NOUT), jnp.float32),
        "b2": 0.1 * jax.random.normal(keys[8], (NOUT,), jnp.float32),
        "Wfc": 0.1 * jax.random.normal(keys[6], (2 * NOUT, NCLS), jnp.float32),
        "bfc": 0.1 * jax.random.normal(keys[9], (NCLS,), jnp.float32),
    }

    out = gnnml3_forward(params, x, A, batch, B)
    out = jax.block_until_ready(out)
    assert out.shape == (B, NCLS)
    assert bool(jnp.all(jnp.isfinite(out)))
    # rows of log_softmax should (approximately) exponentiate-sum to 1
    assert bool(jnp.allclose(jnp.sum(jnp.exp(out), axis=1), 1.0, atol=1e-4))
    print("KERNEL_OK")
</pallas_src>

<mosaic_0001>
module attributes {stable_mosaic.version = 11 : i64} {
  func.func @_mix_kernel(%arg0: i32, %arg1: memref<128x4xf32, #tpu.memory_space<vmem>>, %arg2: memref<4x4x128xf32, #tpu.memory_space<vmem>>, %arg3: memref<4x128x128xbf16, #tpu.memory_space<vmem>>) attributes {dimension_semantics = [#tpu.dimension_semantics<parallel>], iteration_bounds = array<i64: 1>, scalar_prefetch = 0 : i64, scratch_operands = 0 : i64, tpu.core_type = #tpu.core_type<tc>, window_params = [{transform_indices = @transform_0, window_bounds = array<i64: 128, 4>}, {pipeline_mode = #tpu.pipeline_mode<synchronous>, transform_indices = @transform_1, window_bounds = array<i64: 4, 4, 128>}, {transform_indices = @transform_2, window_bounds = array<i64: 4, 128, 128>}]} {
    %c0 = arith.constant 0 : index
    %c0_0 = arith.constant 0 : index
    %0 = vector.load %arg1[%c0, %c0_0] : memref<128x4xf32, #tpu.memory_space<vmem>>, vector<128x4xf32>
    %c0_1 = arith.constant 0 : index
    %c0_2 = arith.constant 0 : index
    %c0_3 = arith.constant 0 : index
    %1 = vector.load %arg2[%c0_1, %c0_2, %c0_3] : memref<4x4x128xf32, #tpu.memory_space<vmem>>, vector<1x4x128xf32>
    %2 = vector.shape_cast %1 : vector<1x4x128xf32> to vector<4x128xf32>
    %cst = arith.constant dense<0.000000e+00> : vector<128x128xf32>
    %3 = tpu.matmul %0, %2, %cst {dimension_numbers = #tpu.dot_dimension_numbers<[1], [0], [0], [1], [0, 0, 1, 1], [], []>} : vector<128x4xf32>, vector<4x128xf32>, vector<128x128xf32> -> vector<128x128xf32>
    %4 = arith.truncf %3 : vector<128x128xf32> to vector<128x128xbf16>
    %c0_4 = arith.constant 0 : index
    %c0_5 = arith.constant 0 : index
    %c0_6 = arith.constant 0 : index
    %5 = vector.load %arg3[%c0_4, %c0_5, %c0_6] : memref<4x128x128xbf16, #tpu.memory_space<vmem>>, vector<1x128x128xbf16>
    %6 = vector.shape_cast %5 : vector<1x128x128xbf16> to vector<128x128xbf16>
    %7 = vector.shape_cast %4 : vector<128x128xbf16> to vector<1x128x128xbf16>
    tpu.vector_store %arg3[%c0_4, %c0_5, %c0_6], %7 {strides = array<i32>} : memref<4x128x128xbf16, #tpu.memory_space<vmem>>, vector<1x128x128xbf16>,
    %c1 = arith.constant 1 : index
    %c0_7 = arith.constant 0 : index
    %c0_8 = arith.constant 0 : index
    %8 = vector.load %arg2[%c1, %c0_7, %c0_8] : memref<4x4x128xf32, #tpu.memory_space<vmem>>, vector<1x4x128xf32>
    %9 = vector.shape_cast %8 : vector<1x4x128xf32> to vector<4x128xf32>
    %cst_9 = arith.constant dense<0.000000e+00> : vector<128x128xf32>
    %10 = tpu.matmul %0, %9, %cst_9 {dimension_numbers = #tpu.dot_dimension_numbers<[1], [0], [0], [1], [0, 0, 1, 1], [], []>} : vector<128x4xf32>, vector<4x128xf32>, vector<128x128xf32> -> vector<128x128xf32>
    %11 = arith.truncf %10 : vector<128x128xf32> to vector<128x128xbf16>
    %c1_10 = arith.constant 1 : index
    %c0_11 = arith.constant 0 : index
    %c0_12 = arith.constant 0 : index
    %12 = vector.load %arg3[%c1_10, %c0_11, %c0_12] : memref<4x128x128xbf16, #tpu.memory_space<vmem>>, vector<1x128x128xbf16>
    %13 = vector.shape_cast %12 : vector<1x128x128xbf16> to vector<128x128xbf16>
    %14 = vector.shape_cast %11 : vector<128x128xbf16> to vector<1x128x128xbf16>
    tpu.vector_store %arg3[%c1_10, %c0_11, %c0_12], %14 {strides = array<i32>} : memref<4x128x128xbf16, #tpu.memory_space<vmem>>, vector<1x128x128xbf16>,
    %c2 = arith.constant 2 : index
    %c0_13 = arith.constant 0 : index
    %c0_14 = arith.constant 0 : index
    %15 = vector.load %arg2[%c2, %c0_13, %c0_14] : memref<4x4x128xf32, #tpu.memory_space<vmem>>, vector<1x4x128xf32>
    %16 = vector.shape_cast %15 : vector<1x4x128xf32> to vector<4x128xf32>
    %cst_15 = arith.constant dense<0.000000e+00> : vector<128x128xf32>
    %17 = tpu.matmul %0, %16, %cst_15 {dimension_numbers = #tpu.dot_dimension_numbers<[1], [0], [0], [1], [0, 0, 1, 1], [], []>} : vector<128x4xf32>, vector<4x128xf32>, vector<128x128xf32> -> vector<128x128xf32>
    %18 = arith.truncf %17 : vector<128x128xf32> to vector<128x128xbf16>
    %c2_16 = arith.constant 2 : index
    %c0_17 = arith.constant 0 : index
    %c0_18 = arith.constant 0 : index
    %19 = vector.load %arg3[%c2_16, %c0_17, %c0_18] : memref<4x128x128xbf16, #tpu.memory_space<vmem>>, vector<1x128x128xbf16>
    %20 = vector.shape_cast %19 : vector<1x128x128xbf16> to vector<128x128xbf16>
    %21 = vector.shape_cast %18 : vector<128x128xbf16> to vector<1x128x128xbf16>
    tpu.vector_store %arg3[%c2_16, %c0_17, %c0_18], %21 {strides = array<i32>} : memref<4x128x128xbf16, #tpu.memory_space<vmem>>, vector<1x128x128xbf16>,
    %c3 = arith.constant 3 : index
    %c0_19 = arith.constant 0 : index
    %c0_20 = arith.constant 0 : index
    %22 = vector.load %arg2[%c3, %c0_19, %c0_20] : memref<4x4x128xf32, #tpu.memory_space<vmem>>, vector<1x4x128xf32>
    %23 = vector.shape_cast %22 : vector<1x4x128xf32> to vector<4x128xf32>
    %cst_21 = arith.constant dense<0.000000e+00> : vector<128x128xf32>
    %24 = tpu.matmul %0, %23, %cst_21 {dimension_numbers = #tpu.dot_dimension_numbers<[1], [0], [0], [1], [0, 0, 1, 1], [], []>} : vector<128x4xf32>, vector<4x128xf32>, vector<128x128xf32> -> vector<128x128xf32>
    %25 = arith.truncf %24 : vector<128x128xf32> to vector<128x128xbf16>
    %c3_22 = arith.constant 3 : index
    %c0_23 = arith.constant 0 : index
    %c0_24 = arith.constant 0 : index
    %26 = vector.load %arg3[%c3_22, %c0_23, %c0_24] : memref<4x128x128xbf16, #tpu.memory_space<vmem>>, vector<1x128x128xbf16>
    %27 = vector.shape_cast %26 : vector<1x128x128xbf16> to vector<128x128xbf16>
    %28 = vector.shape_cast %25 : vector<128x128xbf16> to vector<1x128x128xbf16>
    tpu.vector_store %arg3[%c3_22, %c0_23, %c0_24], %28 {strides = array<i32>} : memref<4x128x128xbf16, #tpu.memory_space<vmem>>, vector<1x128x128xbf16>,
    return
  }
  func.func @transform_0(%arg0: i32) -> (i32, i32) {
    %c0_i32 = arith.constant 0 : i32
    %c0_i32_0 = arith.constant 0 : i32
    return %arg0, %c0_i32 : i32, i32
  }
  func.func @transform_1(%arg0: i32) -> (i32, i32, i32) {
    %c0_i32 = arith.constant 0 : i32
    %c0_i32_0 = arith.constant 0 : i32
    %c0_i32_1 = arith.constant 0 : i32
    %c0_i32_2 = arith.constant 0 : i32
    return %c0_i32, %c0_i32_0, %c0_i32_1 : i32, i32, i32
  }
  func.func @transform_2(%arg0: i32) -> (i32, i32, i32) {
    %c0_i32 = arith.constant 0 : i32
    %c0_i32_0 = arith.constant 0 : i32
    %c0_i32_1 = arith.constant 0 : i32
    return %c0_i32, %arg0, %c0_i32_0 : i32, i32, i32
  }
}

</mosaic_0001>

<llo_original>
// kernel: tpu_custom_call.1
$region0: #{tpu_custom_call.1}
  #allocation0 [shape = 'u32[]', space=smem, size = 0x4, offset = 0x4, fixed_abs, tag = 'smem constant byte address 0x4 - core index']
  #allocation1 [shape = 'u32[144,128]{1,0:T(1,128)}', space=vmem, size = 0x12000, scoped, tag = 'internal scratch']
  %s0 = inlined_call_operand.vmem [shape: f32[128,4], index: 0, kind: input, shape index: {}]
  %s1 = inlined_call_operand.vmem [shape: f32[4,4,128], index: 1, kind: input, shape index: {}]
  %s2 = inlined_call_operand.hbm [shape: bf16[4,128,128], index: 2, kind: output, shape index: {}]
  %s3 = sld [smem:[#allocation0]]
  $region18: #{tpu_custom_call.1} parent=0
    _
  %s5 = ssub.s32 1, %s3
  %s6 = scalar_select 0, %s5, %s3
  $region1: #{tpu_custom_call.1} parent=0
    #allocation2 [shape = 'u8[131072]{0}', space=vmem, size = 0x20000, scoped, tag = 'output window, operand 0, single buffered']
    #allocation3 [shape = 's32[1]{0}', space=sflag, size = 0x4, scoped, tag = 'scoped memory for tpu_custom_call.1']
    %7 = vsyncpa [#allocation3], 0
    // Predicated region
    $region2: #{tpu_custom_call.1} parent=1 // pred_check
      _
    $region3: #{tpu_custom_call.1} parent=1 // pred_check_branch
      %9 = sbr.rel (0) target = $region5
    $region4: #{tpu_custom_call.1} parent=1 // pred_region
      _
    $region5: #{tpu_custom_call.1} parent=1 // pred_fallthru
      _
    // Predicated region
    $region6: #{tpu_custom_call.1} parent=1 // pred_check
      _
    $region7: #{tpu_custom_call.1} parent=1 // pred_check_branch
      %11 = sbr.rel (0) target = $region9
    $region8: #{tpu_custom_call.1} parent=1 // pred_region
      _
    $region9: #{tpu_custom_call.1} parent=1 // pred_fallthru
      _
    %v12 = vld [vmem:[%s0] sm:$0xff]
    %v13 = vld [vmem:[%s0 + $0x8] sm:$0xff]
    %v14 = vld [vmem:[%s0 + $0x10] sm:$0xff]
    %v15 = vld [vmem:[%s0 + $0x18] sm:$0xff]
    %v16 = vld [vmem:[%s0 + $0x20] sm:$0xff]
    %v17 = vld [vmem:[%s0 + $0x28] sm:$0xff]
    %v18 = vld [vmem:[%s0 + $0x30] sm:$0xff]
    %v19 = vld [vmem:[%s0 + $0x38] sm:$0xff]
    %v20 = vld [vmem:[%s0 + $0x40] sm:$0xff]
    %v21 = vld [vmem:[%s0 + $0x48] sm:$0xff]
    %v22 = vld [vmem:[%s0 + $0x50] sm:$0xff]
    %v23 = vld [vmem:[%s0 + $0x58] sm:$0xff]
    %v24 = vld [vmem:[%s0 + $0x60] sm:$0xff]
    %v25 = vld [vmem:[%s0 + $0x68] sm:$0xff]
    %v26 = vld [vmem:[%s0 + $0x70] sm:$0xff]
    %v27 = vld [vmem:[%s0 + $0x78] sm:$0xff]
    %v28 = vld [vmem:[%s1] sm:$0xf]
    %vm29 = vcmask 31744
    %v31 = vsel %vm29, %v12, 0
    %v34 = vsel %vm29, %v13, 0
    %v37 = vsel %vm29, %v14, 0
    %v40 = vsel %vm29, %v15, 0
    %v43 = vsel %vm29, %v16, 0
    %v46 = vsel %vm29, %v17, 0
    %v49 = vsel %vm29, %v18, 0
    %v52 = vsel %vm29, %v19, 0
    %v55 = vsel %vm29, %v20, 0
    %v58 = vsel %vm29, %v21, 0
    %v61 = vsel %vm29, %v22, 0
    %v64 = vsel %vm29, %v23, 0
    %v67 = vsel %vm29, %v24, 0
    %v70 = vsel %vm29, %v25, 0
    %v73 = vsel %vm29, %v26, 0
    %v76 = vsel %vm29, %v27, 0
    %vm78 = vcmask 1043456
    %v80 = vsel %vm78, %v28, 0
    %82 = vmatprep.subr.mxu0 0.0
    %83 = vmatpush1.msra.mxu0 %v80
    %84 = vmatprep.subr.mxu0 0.0
    %85 = vmatpush1.msra.mxu0 0.0
    %86 = vmatprep.subr.mxu0 0.0
    %87 = vmatpush1.msra.mxu0 0.0
    %88 = vmatprep.subr.mxu0 0.0
    %89 = vmatpush1.msra.mxu0 0.0
    %90 = vmatprep.subr.mxu0 0.0
    %91 = vmatpush1.msra.mxu0 0.0
    %92 = vmatprep.subr.mxu0 0.0
    %93 = vmatpush1.msra.mxu0 0.0
    %94 = vmatprep.subr.mxu0 0.0
    %95 = vmatpush1.msra.mxu0 0.0
    %96 = vmatprep.subr.mxu0 0.0
    %97 = vmatpush1.msra.mxu0 0.0
    %98 = vmatprep.subr.mxu0 0.0
    %99 = vmatpush1.msra.mxu0 0.0
    %100 = vmatprep.subr.mxu0 0.0
    %101 = vmatpush1.msra.mxu0 0.0
    %102 = vmatprep.subr.mxu0 0.0
    %103 = vmatpush1.msra.mxu0 0.0
    %104 = vmatprep.subr.mxu0 0.0
    %105 = vmatpush1.msra.mxu0 0.0
    %106 = vmatprep.subr.mxu0 0.0
    %107 = vmatpush1.msra.mxu0 0.0
    %108 = vmatprep.subr.mxu0 0.0
    %109 = vmatpush1.msra.mxu0 0.0
    %110 = vmatprep.subr.mxu0 0.0
    %111 = vmatpush1.msra.mxu0 0.0
    %112 = vmatprep.subr.mxu0 0.0
    %113 = vmatpush1.msra.mxu0 0.0
    %114 = vmatprep.subr.mxu0 0.0
    %115 = vmatpush1.msra.mxu0 0.0
    %116 = vmatprep.subr.mxu0 0.0
    %117 = vmatpush1.msra.mxu0 0.0
    %118 = vmatprep.subr.mxu0 0.0
    %119 = vmatpush1.msra.mxu0 0.0
    %120 = vmatprep.subr.mxu0 0.0
    %121 = vmatpush1.msra.mxu0 0.0
    %122 = vmatprep.subr.mxu0 0.0
    %123 = vmatpush1.msra.mxu0 0.0
    %124 = vmatprep.subr.mxu0 0.0
    %125 = vmatpush1.msra.mxu0 0.0
    %126 = vmatprep.subr.mxu0 0.0
    %127 = vmatpush1.msra.mxu0 0.0
    %128 = vmatprep.subr.mxu0 0.0
    %129 = vmatpush1.msra.mxu0 0.0
    %130 = vmatprep.subr.mxu0 0.0
    %131 = vmatpush1.msra.mxu0 0.0
    %132 = vmatprep.subr.mxu0 0.0
    %133 = vmatpush1.msra.mxu0 0.0
    %134 = vmatprep.subr.mxu0 0.0
    %135 = vmatpush1.msra.mxu0 0.0
    %136 = vmatprep.subr.mxu0 0.0
    %137 = vmatpush1.msra.mxu0 0.0
    %138 = vmatprep.subr.mxu0 0.0
    %139 = vmatpush1.msra.mxu0 0.0
    %140 = vmatprep.subr.mxu0 0.0
    %141 = vmatpush1.msra.mxu0 0.0
    %142 = vmatprep.subr.mxu0 0.0
    %143 = vmatpush1.msra.mxu0 0.0
    %144 = vmatprep.subr.mxu0 0.0
    %145 = vmatpush1.msra.mxu0 0.0
    %146 = vmatprep.mubr.f32.mxu0 0.0
    %147 = vmatmul.mubr.f32.gmra.mrb[0].mxu0 %v31
    %v148 = vpop.f32.mrb[0].mxu0
    %v149 = vadd.f32 0.0, %v148
    %v150 = vpop.f32.mrb[0].mxu0
    %151 = vmatprep.mubr.f32.mxu0 0.0
    %152 = vmatmul.mubr.f32.gmra.mrb[0].mxu0 %v34
    %v153 = vpop.f32.mrb[0].mxu0
    %v154 = vadd.f32 0.0, %v153
    %v155 = vpop.f32.mrb[0].mxu0
    %156 = vmatprep.mubr.f32.mxu0 0.0
    %157 = vmatmul.mubr.f32.gmra.mrb[0].mxu0 %v37
    %v158 = vpop.f32.mrb[0].mxu0
    %v159 = vadd.f32 0.0, %v158
    %v160 = vpop.f32.mrb[0].mxu0
    %161 = vmatprep.mubr.f32.mxu0 0.0
    %162 = vmatmul.mubr.f32.gmra.mrb[0].mxu0 %v40
    %v163 = vpop.f32.mrb[0].mxu0
    %v164 = vadd.f32 0.0, %v163
    %v165 = vpop.f32.mrb[0].mxu0
    %166 = vmatprep.mubr.f32.mxu0 0.0
    %167 = vmatmul.mubr.f32.gmra.mrb[0].mxu0 %v43
    %v168 = vpop.f32.mrb[0].mxu0
    %v169 = vadd.f32 0.0, %v168
    %v170 = vpop.f32.mrb[0].mxu0
    %171 = vmatprep.mubr.f32.mxu0 0.0
    %172 = vmatmul.mubr.f32.gmra.mrb[0].mxu0 %v46
    %v173 = vpop.f32.mrb[0].mxu0
    %v174 = vadd.f32 0.0, %v173
    %v175 = vpop.f32.mrb[0].mxu0
    %176 = vmatprep.mubr.f32.mxu0 0.0
    %177 = vmatmul.mubr.f32.gmra.mrb[0].mxu0 %v49
    %v178 = vpop.f32.mrb[0].mxu0
    %v179 = vadd.f32 0.0, %v178
    %v180 = vpop.f32.mrb[0].mxu0
    %181 = vmatprep.mubr.f32.mxu0 0.0
    %182 = vmatmul.mubr.f32.gmra.mrb[0].mxu0 %v52
    %v183 = vpop.f32.mrb[0].mxu0
    %v184 = vadd.f32 0.0, %v183
    %v185 = vpop.f32.mrb[0].mxu0
    %186 = vmatprep.mubr.f32.mxu0 0.0
    %187 = vmatmul.mubr.f32.gmra.mrb[0].mxu0 %v55
    %v188 = vpop.f32.mrb[0].mxu0
    %v189 = vadd.f32 0.0, %v188
    %v190 = vpop.f32.mrb[0].mxu0
    %191 = vmatprep.mubr.f32.mxu0 0.0
    %192 = vmatmul.mubr.f32.gmra.mrb[0].mxu0 %v58
    %v193 = vpop.f32.mrb[0].mxu0
    %v194 = vadd.f32 0.0, %v193
    %v195 = vpop.f32.mrb[0].mxu0
    %196 = vmatprep.mubr.f32.mxu0 0.0
    %197 = vmatmul.mubr.f32.gmra.mrb[0].mxu0 %v61
    %v198 = vpop.f32.mrb[0].mxu0
    %v199 = vadd.f32 0.0, %v198
    %v200 = vpop.f32.mrb[0].mxu0
    %201 = vmatprep.mubr.f32.mxu0 0.0
    %202 = vmatmul.mubr.f32.gmra.mrb[0].mxu0 %v64
    %v203 = vpop.f32.mrb[0].mxu0
    %v204 = vadd.f32 0.0, %v203
    %v205 = vpop.f32.mrb[0].mxu0
    %206 = vmatprep.mubr.f32.mxu0 0.0
    %207 = vmatmul.mubr.f32.gmra.mrb[0].mxu0 %v67
    %v208 = vpop.f32.mrb[0].mxu0
    %v209 = vadd.f32 0.0, %v208
    %v210 = vpop.f32.mrb[0].mxu0
    %211 = vmatprep.mubr.f32.mxu0 0.0
    %212 = vmatmul.mubr.f32.gmra.mrb[0].mxu0 %v70
    %v213 = vpop.f32.mrb[0].mxu0
    %v214 = vadd.f32 0.0, %v213
    %v215 = vpop.f32.mrb[0].mxu0
    %216 = vmatprep.mubr.f32.mxu0 0.0
    %217 = vmatmul.mubr.f32.gmra.mrb[0].mxu0 %v73
    %v218 = vpop.f32.mrb[0].mxu0
    %v219 = vadd.f32 0.0, %v218
    %v220 = vpop.f32.mrb[0].mxu0
    %221 = vmatprep.mubr.f32.mxu0 0.0
    %222 = vmatmul.mubr.f32.gmra.mrb[0].mxu0 %v76
    %v223 = vpop.f32.mrb[0].mxu0
    %v224 = vadd.f32 0.0, %v223
    %v225 = vpop.f32.mrb[0].mxu0
    %226 = vdwg.mxu0
    %v227 = vpack.c.bf16 %v154, %v149
    %v228 = vpack.c.bf16 %v164, %v159
    %v229 = vpack.c.bf16 %v174, %v169
    %v230 = vpack.c.bf16 %v184, %v179
    %v231 = vpack.c.bf16 %v194, %v189
    %v232 = vpack.c.bf16 %v204, %v199
    %v233 = vpack.c.bf16 %v214, %v209
    %v234 = vpack.c.bf16 %v224, %v219
    %v243 = vunpack.c.l.b16 %v227
    %v244 = vunpack.c.h.b16 %v227
    %v245 = vunpack.c.l.b16 %v228
    %v246 = vunpack.c.h.b16 %v228
    %v247 = vunpack.c.l.b16 %v229
    %v248 = vunpack.c.h.b16 %v229
    %v249 = vunpack.c.l.b16 %v230
    %v250 = vunpack.c.h.b16 %v230
    %v251 = vunpack.c.l.b16 %v231
    %v252 = vunpack.c.h.b16 %v231
    %v253 = vunpack.c.l.b16 %v232
    %v254 = vunpack.c.h.b16 %v232
    %v255 = vunpack.c.l.b16 %v233
    %v256 = vunpack.c.h.b16 %v233
    %v257 = vunpack.c.l.b16 %v234
    %v258 = vunpack.c.h.b16 %v234
    %v259 = vpack.c.b16 %v243, %v243
    %v260 = vpack.c.b16 %v244, %v244
    %v261 = vpack.c.b16 %v245, %v245
    %v262 = vpack.c.b16 %v246, %v246
    %v263 = vpack.c.b16 %v247, %v247
    %v264 = vpack.c.b16 %v248, %v248
    %v265 = vpack.c.b16 %v249, %v249
    %v266 = vpack.c.b16 %v250, %v250
    %v267 = vpack.c.b16 %v251, %v251
    %v268 = vpack.c.b16 %v252, %v252
    %v269 = vpack.c.b16 %v253, %v253
    %v270 = vpack.c.b16 %v254, %v254
    %v271 = vpack.c.b16 %v255, %v255
    %v272 = vpack.c.b16 %v256, %v256
    %v273 = vpack.c.b16 %v257, %v257
    %v274 = vpack.c.b16 %v258, %v258
    %291 = vst [vmem:[#allocation2] sm:$0xf] %v259
    %292 = vst [vmem:[#allocation2 + $0x4] sm:$0xf] %v260
    %293 = vst [vmem:[#allocation2 + $0x8] sm:$0xf] %v261
    %294 = vst [vmem:[#allocation2 + $0xc] sm:$0xf] %v262
    %295 = vst [vmem:[#allocation2 + $0x10] sm:$0xf] %v263
    %296 = vst [vmem:[#allocation2 + $0x14] sm:$0xf] %v264
    %297 = vst [vmem:[#allocation2 + $0x18] sm:$0xf] %v265
    %298 = vst [vmem:[#allocation2 + $0x1c] sm:$0xf] %v266
    %299 = vst [vmem:[#allocation2 + $0x20] sm:$0xf] %v267
    %300 = vst [vmem:[#allocation2 + $0x24] sm:$0xf] %v268
    %301 = vst [vmem:[#allocation2 + $0x28] sm:$0xf] %v269
    %302 = vst [vmem:[#allocation2 + $0x2c] sm:$0xf] %v270
    %303 = vst [vmem:[#allocation2 + $0x30] sm:$0xf] %v271
    %304 = vst [vmem:[#allocation2 + $0x34] sm:$0xf] %v272
    %305 = vst [vmem:[#allocation2 + $0x38] sm:$0xf] %v273
    %306 = vst [vmem:[#allocation2 + $0x3c] sm:$0xf] %v274
    %s307 = scalar_lea.vmem %s1, 4
    %v308 = vld [vmem:[%s307] sm:$0xf]
    %v310 = vsel %vm78, %v308, 0
    %312 = vmatprep.subr.mxu0 0.0
    %313 = vmatpush1.msra.mxu0 %v310
    %314 = vmatprep.subr.mxu0 0.0
    %315 = vmatpush1.msra.mxu0 0.0
    %316 = vmatprep.subr.mxu0 0.0
    %317 = vmatpush1.msra.mxu0 0.0
    %318 = vmatprep.subr.mxu0 0.0
    %319 = vmatpush1.msra.mxu0 0.0
    %320 = vmatprep.subr.mxu0 0.0
    %321 = vmatpush1.msra.mxu0 0.0
    %322 = vmatprep.subr.mxu0 0.0
    %323 = vmatpush1.msra.mxu0 0.0
    %324 = vmatprep.subr.mxu0 0.0
    %325 = vmatpush1.msra.mxu0 0.0
    %326 = vmatprep.subr.mxu0 0.0
    %327 = vmatpush1.msra.mxu0 0.0
    %328 = vmatprep.subr.mxu0 0.0
    %329 = vmatpush1.msra.mxu0 0.0
    %330 = vmatprep.subr.mxu0 0.0
    %331 = vmatpush1.msra.mxu0 0.0
    %332 = vmatprep.subr.mxu0 0.0
    %333 = vmatpush1.msra.mxu0 0.0
    %334 = vmatprep.subr.mxu0 0.0
    %335 = vmatpush1.msra.mxu0 0.0
    %336 = vmatprep.subr.mxu0 0.0
    %337 = vmatpush1.msra.mxu0 0.0
    %338 = vmatprep.subr.mxu0 0.0
    %339 = vmatpush1.msra.mxu0 0.0
    %340 = vmatprep.subr.mxu0 0.0
    %341 = vmatpush1.msra.mxu0 0.0
    %342 = vmatprep.subr.mxu0 0.0
    %343 = vmatpush1.msra.mxu0 0.0
    %344 = vmatprep.subr.mxu0 0.0
    %345 = vmatpush1.msra.mxu0 0.0
    %346 = vmatprep.subr.mxu0 0.0
    %347 = vmatpush1.msra.mxu0 0.0
    %348 = vmatprep.subr.mxu0 0.0
    %349 = vmatpush1.msra.mxu0 0.0
    %350 = vmatprep.subr.mxu0 0.0
    %351 = vmatpush1.msra.mxu0 0.0
    %352 = vmatprep.subr.mxu0 0.0
    %353 = vmatpush1.msra.mxu0 0.0
    %354 = vmatprep.subr.mxu0 0.0
    %355 = vmatpush1.msra.mxu0 0.0
    %356 = vmatprep.subr.mxu0 0.0
    %357 = vmatpush1.msra.mxu0 0.0
    %358 = vmatprep.subr.mxu0 0.0
    %359 = vmatpush1.msra.mxu0 0.0
    %360 = vmatprep.subr.mxu0 0.0
    %361 = vmatpush1.msra.mxu0 0.0
    %362 = vmatprep.subr.mxu0 0.0
    %363 = vmatpush1.msra.mxu0 0.0
    %364 = vmatprep.subr.mxu0 0.0
    %365 = vmatpush1.msra.mxu0 0.0
    %366 = vmatprep.subr.mxu0 0.0
    %367 = vmatpush1.msra.mxu0 0.0
    %368 = vmatprep.subr.mxu0 0.0
    %369 = vmatpush1.msra.mxu0 0.0
    %370 = vmatprep.subr.mxu0 0.0
    %371 = vmatpush1.msra.mxu0 0.0
    %372 = vmatprep.subr.mxu0 0.0
    %373 = vmatpush1.msra.mxu0 0.0
    %374 = vmatprep.subr.mxu0 0.0
    %375 = vmatpush1.msra.mxu0 0.0
    %376 = vmatprep.mubr.f32.mxu0 0.0
    %377 = vmatmul.mubr.f32.gmra.mrb[0].mxu0 %v31
    %v378 = vpop.f32.mrb[0].mxu0
    %v379 = vadd.f32 0.0, %v378
    %v380 = vpop.f32.mrb[0].mxu0
    %381 = vmatprep.mubr.f32.mxu0 0.0
    %382 = vmatmul.mubr.f32.gmra.mrb[0].mxu0 %v34
    %v383 = vpop.f32.mrb[0].mxu0
    %v384 = vadd.f32 0.0, %v383
    %v385 = vpop.f32.mrb[0].mxu0
    %386 = vmatprep.mubr.f32.mxu0 0.0
    %387 = vmatmul.mubr.f32.gmra.mrb[0].mxu0 %v37
    %v388 = vpop.f32.mrb[0].mxu0
    %v389 = vadd.f32 0.0, %v388
    %v390 = vpop.f32.mrb[0].mxu0
    %391 = vmatprep.mubr.f32.mxu0 0.0
    %392 = vmatmul.mubr.f32.gmra.mrb[0].mxu0 %v40
    %v393 = vpop.f32.mrb[0].mxu0
    %v394 = vadd.f32 0.0, %v393
    %v395 = vpop.f32.mrb[0].mxu0
    %396 = vmatprep.mubr.f32.mxu0 0.0
    %397 = vmatmul.mubr.f32.gmra.mrb[0].mxu0 %v43
    %v398 = vpop.f32.mrb[0].mxu0
    %v399 = vadd.f32 0.0, %v398
    %v400 = vpop.f32.mrb[0].mxu0
    %401 = vmatprep.mubr.f32.mxu0 0.0
    %402 = vmatmul.mubr.f32.gmra.mrb[0].mxu0 %v46
    %v403 = vpop.f32.mrb[0].mxu0
    %v404 = vadd.f32 0.0, %v403
    %v405 = vpop.f32.mrb[0].mxu0
    %406 = vmatprep.mubr.f32.mxu0 0.0
    %407 = vmatmul.mubr.f32.gmra.mrb[0].mxu0 %v49
    %v408 = vpop.f32.mrb[0].mxu0
    %v409 = vadd.f32 0.0, %v408
    %v410 = vpop.f32.mrb[0].mxu0
    %411 = vmatprep.mubr.f32.mxu0 0.0
    %412 = vmatmul.mubr.f32.gmra.mrb[0].mxu0 %v52
    %v413 = vpop.f32.mrb[0].mxu0
    %v414 = vadd.f32 0.0, %v413
    %v415 = vpop.f32.mrb[0].mxu0
    %416 = vmatprep.mubr.f32.mxu0 0.0
    %417 = vmatmul.mubr.f32.gmra.mrb[0].mxu0 %v55
    %v418 = vpop.f32.mrb[0].mxu0
    %v419 = vadd.f32 0.0, %v418
    %v420 = vpop.f32.mrb[0].mxu0
    %421 = vmatprep.mubr.f32.mxu0 0.0
    %422 = vmatmul.mubr.f32.gmra.mrb[0].mxu0 %v58
    %v423 = vpop.f32.mrb[0].mxu0
    %v424 = vadd.f32 0.0, %v423
    %v425 = vpop.f32.mrb[0].mxu0
    %426 = vmatprep.mubr.f32.mxu0 0.0
    %427 = vmatmul.mubr.f32.gmra.mrb[0].mxu0 %v61
    %v428 = vpop.f32.mrb[0].mxu0
    %v429 = vadd.f32 0.0, %v428
    %v430 = vpop.f32.mrb[0].mxu0
    %431 = vmatprep.mubr.f32.mxu0 0.0
    %432 = vmatmul.mubr.f32.gmra.mrb[0].mxu0 %v64
    %v433 = vpop.f32.mrb[0].mxu0
    %v434 = vadd.f32 0.0, %v433
    %v435 = vpop.f32.mrb[0].mxu0
    %436 = vmatprep.mubr.f32.mxu0 0.0
    %437 = vmatmul.mubr.f32.gmra.mrb[0].mxu0 %v67
    %v438 = vpop.f32.mrb[0].mxu0
    %v439 = vadd.f32 0.0, %v438
    %v440 = vpop.f32.mrb[0].mxu0
    %441 = vmatprep.mubr.f32.mxu0 0.0
    %442 = vmatmul.mubr.f32.gmra.mrb[0].mxu0 %v70
    %v443 = vpop.f32.mrb[0].mxu0
    %v444 = vadd.f32 0.0, %v443
    %v445 = vpop.f32.mrb[0].mxu0
    %446 = vmatprep.mubr.f32.mxu0 0.0
    %447 = vmatmul.mubr.f32.gmra.mrb[0].mxu0 %v73
    %v448 = vpop.f32.mrb[0].mxu0
    %v449 = vadd.f32 0.0, %v448
    %v450 = vpop.f32.mrb[0].mxu0
    %451 = vmatprep.mubr.f32.mxu0 0.0
    %452 = vmatmul.mubr.f32.gmra.mrb[0].mxu0 %v76
    %v453 = vpop.f32.mrb[0].mxu0
    %v454 = vadd.f32 0.0, %v453
    %v455 = vpop.f32.mrb[0].mxu0
    %456 = vdwg.mxu0
    %v457 = vpack.c.bf16 %v384, %v379
    %v458 = vpack.c.bf16 %v394, %v389
    %v459 = vpack.c.bf16 %v404, %v399
    %v460 = vpack.c.bf16 %v414, %v409
    %v461 = vpack.c.bf16 %v424, %v419
    %v462 = vpack.c.bf16 %v434, %v429
    %v463 = vpack.c.bf16 %v444, %v439
    %v464 = vpack.c.bf16 %v454, %v449
    %v473 = vunpack.c.l.b16 %v457
    %v474 = vunpack.c.h.b16 %v457
    %v475 = vunpack.c.l.b16 %v458
    %v476 = vunpack.c.h.b16 %v458
    %v477 = vunpack.c.l.b16 %v459
    %v478 = vunpack.c.h.b16 %v459
    %v479 = vunpack.c.l.b16 %v460
    %v480 = vunpack.c.h.b16 %v460
    %v481 = vunpack.c.l.b16 %v461
    %v482 = vunpack.c.h.b16 %v461
    %v483 = vunpack.c.l.b16 %v462
    %v484 = vunpack.c.h.b16 %v462
    %v485 = vunpack.c.l.b16 %v463
    %v486 = vunpack.c.h.b16 %v463
    %v487 = vunpack.c.l.b16 %v464
    %v488 = vunpack.c.h.b16 %v464
    %v489 = vpack.c.b16 %v473, %v473
    %v490 = vpack.c.b16 %v474, %v474
    %v491 = vpack.c.b16 %v475, %v475
    %v492 = vpack.c.b16 %v476, %v476
    %v493 = vpack.c.b16 %v477, %v477
    %v494 = vpack.c.b16 %v478, %v478
    %v495 = vpack.c.b16 %v479, %v479
    %v496 = vpack.c.b16 %v480, %v480
    %v497 = vpack.c.b16 %v481, %v481
    %v498 = vpack.c.b16 %v482, %v482
    %v499 = vpack.c.b16 %v483, %v483
    %v500 = vpack.c.b16 %v484, %v484
    %v501 = vpack.c.b16 %v485, %v485
    %v502 = vpack.c.b16 %v486, %v486
    %v503 = vpack.c.b16 %v487, %v487
    %v504 = vpack.c.b16 %v488, %v488
    %s521 = scalar_lea.vmem [#allocation2], 64
    %522 = vst [vmem:[%s521] sm:$0xf] %v489
    %523 = vst [vmem:[%s521 + $0x4] sm:$0xf] %v490
    %524 = vst [vmem:[%s521 + $0x8] sm:$0xf] %v491
    %525 = vst [vmem:[%s521 + $0xc] sm:$0xf] %v492
    %526 = vst [vmem:[%s521 + $0x10] sm:$0xf] %v493
    %527 = vst [vmem:[%s521 + $0x14] sm:$0xf] %v494
    %528 = vst [vmem:[%s521 + $0x18] sm:$0xf] %v495
    %529 = vst [vmem:[%s521 + $0x1c] sm:$0xf] %v496
    %530 = vst [vmem:[%s521 + $0x20] sm:$0xf] %v497
    %531 = vst [vmem:[%s521 + $0x24] sm:$0xf] %v498
    %532 = vst [vmem:[%s521 + $0x28] sm:$0xf] %v499
    %533 = vst [vmem:[%s521 + $0x2c] sm:$0xf] %v500
    %534 = vst [vmem:[%s521 + $0x30] sm:$0xf] %v501
    %535 = vst [vmem:[%s521 + $0x34] sm:$0xf] %v502
    %536 = vst [vmem:[%s521 + $0x38] sm:$0xf] %v503
    %537 = vst [vmem:[%s521 + $0x3c] sm:$0xf] %v504
    %s538 = scalar_lea.vmem %s1, 8
    %v539 = vld [vmem:[%s538] sm:$0xf]
    %v541 = vsel %vm78, %v539, 0
    %543 = vmatprep.subr.mxu0 0.0
    %544 = vmatpush1.msra.mxu0 %v541
    %545 = vmatprep.subr.mxu0 0.0
    %546 = vmatpush1.msra.mxu0 0.0
    %547 = vmatprep.subr.mxu0 0.0
    %548 = vmatpush1.msra.mxu0 0.0
    %549 = vmatprep.subr.mxu0 0.0
    %550 = vmatpush1.msra.mxu0 0.0
    %551 = vmatprep.subr.mxu0 0.0
    %552 = vmatpush1.msra.mxu0 0.0
    %553 = vmatprep.subr.mxu0 0.0
    %554 = vmatpush1.msra.mxu0 0.0
    %555 = vmatprep.subr.mxu0 0.0
    %556 = vmatpush1.msra.mxu0 0.0
    %557 = vmatprep.subr.mxu0 0.0
    %558 = vmatpush1.msra.mxu0 0.0
    %559 = vmatprep.subr.mxu0 0.0
    %560 = vmatpush1.msra.mxu0 0.0
    %561 = vmatprep.subr.mxu0 0.0
    %562 = vmatpush1.msra.mxu0 0.0
    %563 = vmatprep.subr.mxu0 0.0
    %564 = vmatpush1.msra.mxu0 0.0
    %565 = vmatprep.subr.mxu0 0.0
    %566 = vmatpush1.msra.mxu0 0.0
    %567 = vmatprep.subr.mxu0 0.0
    %568 = vmatpush1.msra.mxu0 0.0
    %569 = vmatprep.subr.mxu0 0.0
    %570 = vmatpush1.msra.mxu0 0.0
    %571 = vmatprep.subr.mxu0 0.0
    %572 = vmatpush1.msra.mxu0 0.0
    %573 = vmatprep.subr.mxu0 0.0
    %574 = vmatpush1.msra.mxu0 0.0
    %575 = vmatprep.subr.mxu0 0.0
    %576 = vmatpush1.msra.mxu0 0.0
    %577 = vmatprep.subr.mxu0 0.0
    %578 = vmatpush1.msra.mxu0 0.0
    %579 = vmatprep.subr.mxu0 0.0
    %580 = vmatpush1.msra.mxu0 0.0
    %581 = vmatprep.subr.mxu0 0.0
    %582 = vmatpush1.msra.mxu0 0.0
    %583 = vmatprep.subr.mxu0 0.0
    %584 = vmatpush1.msra.mxu0 0.0
    %585 = vmatprep.subr.mxu0 0.0
    %586 = vmatpush1.msra.mxu0 0.0
    %587 = vmatprep.subr.mxu0 0.0
    %588 = vmatpush1.msra.mxu0 0.0
    %589 = vmatprep.subr.mxu0 0.0
    %590 = vmatpush1.msra.mxu0 0.0
    %591 = vmatprep.subr.mxu0 0.0
    %592 = vmatpush1.msra.mxu0 0.0
    %593 = vmatprep.subr.mxu0 0.0
    %594 = vmatpush1.msra.mxu0 0.0
    %595 = vmatprep.subr.mxu0 0.0
    %596 = vmatpush1.msra.mxu0 0.0
    %597 = vmatprep.subr.mxu0 0.0
    %598 = vmatpush1.msra.mxu0 0.0
    %599 = vmatprep.subr.mxu0 0.0
    %600 = vmatpush1.msra.mxu0 0.0
    %601 = vmatprep.subr.mxu0 0.0
    %602 = vmatpush1.msra.mxu0 0.0
    %603 = vmatprep.subr.mxu0 0.0
    %604 = vmatpush1.msra.mxu0 0.0
    %605 = vmatprep.subr.mxu0 0.0
    %606 = vmatpush1.msra.mxu0 0.0
    %607 = vmatprep.mubr.f32.mxu0 0.0
    %608 = vmatmul.mubr.f32.gmra.mrb[0].mxu0 %v31
    %v609 = vpop.f32.mrb[0].mxu0
    %v610 = vadd.f32 0.0, %v609
    %v611 = vpop.f32.mrb[0].mxu0
    %612 = vmatprep.mubr.f32.mxu0 0.0
    %613 = vmatmul.mubr.f32.gmra.mrb[0].mxu0 %v34
    %v614 = vpop.f32.mrb[0].mxu0
    %v615 = vadd.f32 0.0, %v614
    %v616 = vpop.f32.mrb[0].mxu0
    %617 = vmatprep.mubr.f32.mxu0 0.0
    %618 = vmatmul.mubr.f32.gmra.mrb[0].mxu0 %v37
    %v619 = vpop.f32.mrb[0].mxu0
    %v620 = vadd.f32 0.0, %v619
    %v621 = vpop.f32.mrb[0].mxu0
    %622 = vmatprep.mubr.f32.mxu0 0.0
    %623 = vmatmul.mubr.f32.gmra.mrb[0].mxu0 %v40
    %v624 = vpop.f32.mrb[0].mxu0
    %v625 = vadd.f32 0.0, %v624
    %v626 = vpop.f32.mrb[0].mxu0
    %627 = vmatprep.mubr.f32.mxu0 0.0
    %628 = vmatmul.mubr.f32.gmra.mrb[0].mxu0 %v43
    %v629 = vpop.f32.mrb[0].mxu0
    %v630 = vadd.f32 0.0, %v629
    %v631 = vpop.f32.mrb[0].mxu0
    %632 = vmatprep.mubr.f32.mxu0 0.0
    %633 = vmatmul.mubr.f32.gmra.mrb[0].mxu0 %v46
    %v634 = vpop.f32.mrb[0].mxu0
    %v635 = vadd.f32 0.0, %v634
    %v636 = vpop.f32.mrb[0].mxu0
    %637 = vmatprep.mubr.f32.mxu0 0.0
    %638 = vmatmul.mubr.f32.gmra.mrb[0].mxu0 %v49
    %v639 = vpop.f32.mrb[0].mxu0
    %v640 = vadd.f32 0.0, %v639
    %v641 = vpop.f32.mrb[0].mxu0
    %642 = vmatprep.mubr.f32.mxu0 0.0
    %643 = vmatmul.mubr.f32.gmra.mrb[0].mxu0 %v52
    %v644 = vpop.f32.mrb[0].mxu0
    %v645 = vadd.f32 0.0, %v644
    %v646 = vpop.f32.mrb[0].mxu0
    %647 = vmatprep.mubr.f32.mxu0 0.0
    %648 = vmatmul.mubr.f32.gmra.mrb[0].mxu0 %v55
    %v649 = vpop.f32.mrb[0].mxu0
    %v650 = vadd.f32 0.0, %v649
    %v651 = vpop.f32.mrb[0].mxu0
    %652 = vmatprep.mubr.f32.mxu0 0.0
    %653 = vmatmul.mubr.f32.gmra.mrb[0].mxu0 %v58
    %v654 = vpop.f32.mrb[0].mxu0
    %v655 = vadd.f32 0.0, %v654
    %v656 = vpop.f32.mrb[0].mxu0
    %657 = vmatprep.mubr.f32.mxu0 0.0
    %658 = vmatmul.mubr.f32.gmra.mrb[0].mxu0 %v61
    %v659 = vpop.f32.mrb[0].mxu0
    %v660 = vadd.f32 0.0, %v659
    %v661 = vpop.f32.mrb[0].mxu0
    %662 = vmatprep.mubr.f32.mxu0 0.0
    %663 = vmatmul.mubr.f32.gmra.mrb[0].mxu0 %v64
    %v664 = vpop.f32.mrb[0].mxu0
    %v665 = vadd.f32 0.0, %v664
    %v666 = vpop.f32.mrb[0].mxu0
    %667 = vmatprep.mubr.f32.mxu0 0.0
    %668 = vmatmul.mubr.f32.gmra.mrb[0].mxu0 %v67
    %v669 = vpop.f32.mrb[0].mxu0
    %v670 = vadd.f32 0.0, %v669
    %v671 = vpop.f32.mrb[0].mxu0
    %672 = vmatprep.mubr.f32.mxu0 0.0
    %673 = vmatmul.mubr.f32.gmra.mrb[0].mxu0 %v70
    %v674 = vpop.f32.mrb[0].mxu0
    %v675 = vadd.f32 0.0, %v674
    %v676 = vpop.f32.mrb[0].mxu0
    %677 = vmatprep.mubr.f32.mxu0 0.0
    %678 = vmatmul.mubr.f32.gmra.mrb[0].mxu0 %v73
    %v679 = vpop.f32.mrb[0].mxu0
    %v680 = vadd.f32 0.0, %v679
    %v681 = vpop.f32.mrb[0].mxu0
    %682 = vmatprep.mubr.f32.mxu0 0.0
    %683 = vmatmul.mubr.f32.gmra.mrb[0].mxu0 %v76
    %v684 = vpop.f32.mrb[0].mxu0
    %v685 = vadd.f32 0.0, %v684
    %v686 = vpop.f32.mrb[0].mxu0
    %687 = vdwg.mxu0
    %v688 = vpack.c.bf16 %v615, %v610
    %v689 = vpack.c.bf16 %v625, %v620
    %v690 = vpack.c.bf16 %v635, %v630
    %v691 = vpack.c.bf16 %v645, %v640
    %v692 = vpack.c.bf16 %v655, %v650
    %v693 = vpack.c.bf16 %v665, %v660
    %v694 = vpack.c.bf16 %v675, %v670
    %v695 = vpack.c.bf16 %v685, %v680
    %v704 = vunpack.c.l.b16 %v688
    %v705 = vunpack.c.h.b16 %v688
    %v706 = vunpack.c.l.b16 %v689
    %v707 = vunpack.c.h.b16 %v689
    %v708 = vunpack.c.l.b16 %v690
    %v709 = vunpack.c.h.b16 %v690
    %v710 = vunpack.c.l.b16 %v691
    %v711 = vunpack.c.h.b16 %v691
    %v712 = vunpack.c.l.b16 %v692
    %v713 = vunpack.c.h.b16 %v692
    %v714 = vunpack.c.l.b16 %v693
    %v715 = vunpack.c.h.b16 %v693
    %v716 = vunpack.c.l.b16 %v694
    %v717 = vunpack.c.h.b16 %v694
    %v718 = vunpack.c.l.b16 %v695
    %v719 = vunpack.c.h.b16 %v695
    %v720 = vpack.c.b16 %v704, %v704
    %v721 = vpack.c.b16 %v705, %v705
    %v722 = vpack.c.b16 %v706, %v706
    %v723 = vpack.c.b16 %v707, %v707
    %v724 = vpack.c.b16 %v708, %v708
    %v725 = vpack.c.b16 %v709, %v709
    %v726 = vpack.c.b16 %v710, %v710
    %v727 = vpack.c.b16 %v711, %v711
    %v728 = vpack.c.b16 %v712, %v712
    %v729 = vpack.c.b16 %v713, %v713
    %v730 = vpack.c.b16 %v714, %v714
    %v731 = vpack.c.b16 %v715, %v715
    %v732 = vpack.c.b16 %v716, %v716
    %v733 = vpack.c.b16 %v717, %v717
    %v734 = vpack.c.b16 %v718, %v718
    %v735 = vpack.c.b16 %v719, %v719
    %s752 = scalar_lea.vmem [#allocation2], 128
    %753 = vst [vmem:[%s752] sm:$0xf] %v720
    %754 = vst [vmem:[%s752 + $0x4] sm:$0xf] %v721
    %755 = vst [vmem:[%s752 + $0x8] sm:$0xf] %v722
    %756 = vst [vmem:[%s752 + $0xc] sm:$0xf] %v723
    %757 = vst [vmem:[%s752 + $0x10] sm:$0xf] %v724
    %758 = vst [vmem:[%s752 + $0x14] sm:$0xf] %v725
    %759 = vst [vmem:[%s752 + $0x18] sm:$0xf] %v726
    %760 = vst [vmem:[%s752 + $0x1c] sm:$0xf] %v727
    %761 = vst [vmem:[%s752 + $0x20] sm:$0xf] %v728
    %762 = vst [vmem:[%s752 + $0x24] sm:$0xf] %v729
    %763 = vst [vmem:[%s752 + $0x28] sm:$0xf] %v730
    %764 = vst [vmem:[%s752 + $0x2c] sm:$0xf] %v731
    %765 = vst [vmem:[%s752 + $0x30] sm:$0xf] %v732
    %766 = vst [vmem:[%s752 + $0x34] sm:$0xf] %v733
    %767 = vst [vmem:[%s752 + $0x38] sm:$0xf] %v734
    %768 = vst [vmem:[%s752 + $0x3c] sm:$0xf] %v735
    %s769 = scalar_lea.vmem %s1, 12
    %v770 = vld [vmem:[%s769] sm:$0xf]
    %v772 = vsel %vm78, %v770, 0
    %774 = vmatprep.subr.mxu0 0.0
    %775 = vmatpush1.msra.mxu0 %v772
    %776 = vmatprep.subr.mxu0 0.0
    %777 = vmatpush1.msra.mxu0 0.0
    %778 = vmatprep.subr.mxu0 0.0
    %779 = vmatpush1.msra.mxu0 0.0
    %780 = vmatprep.subr.mxu0 0.0
    %781 = vmatpush1.msra.mxu0 0.0
    %782 = vmatprep.subr.mxu0 0.0
    %783 = vmatpush1.msra.mxu0 0.0
    %784 = vmatprep.subr.mxu0 0.0
    %785 = vmatpush1.msra.mxu0 0.0
    %786 = vmatprep.subr.mxu0 0.0
    %787 = vmatpush1.msra.mxu0 0.0
    %788 = vmatprep.subr.mxu0 0.0
    %789 = vmatpush1.msra.mxu0 0.0
    %790 = vmatprep.subr.mxu0 0.0
    %791 = vmatpush1.msra.mxu0 0.0
    %792 = vmatprep.subr.mxu0 0.0
    %793 = vmatpush1.msra.mxu0 0.0
    %794 = vmatprep.subr.mxu0 0.0
    %795 = vmatpush1.msra.mxu0 0.0
    %796 = vmatprep.subr.mxu0 0.0
    %797 = vmatpush1.msra.mxu0 0.0
    %798 = vmatprep.subr.mxu0 0.0
    %799 = vmatpush1.msra.mxu0 0.0
    %800 = vmatprep.subr.mxu0 0.0
    %801 = vmatpush1.msra.mxu0 0.0
    %802 = vmatprep.subr.mxu0 0.0
    %803 = vmatpush1.msra.mxu0 0.0
    %804 = vmatprep.subr.mxu0 0.0
    %805 = vmatpush1.msra.mxu0 0.0
    %806 = vmatprep.subr.mxu0 0.0
    %807 = vmatpush1.msra.mxu0 0.0
    %808 = vmatprep.subr.mxu0 0.0
    %809 = vmatpush1.msra.mxu0 0.0
    %810 = vmatprep.subr.mxu0 0.0
    %811 = vmatpush1.msra.mxu0 0.0
    %812 = vmatprep.subr.mxu0 0.0
    %813 = vmatpush1.msra.mxu0 0.0
    %814 = vmatprep.subr.mxu0 0.0
    %815 = vmatpush1.msra.mxu0 0.0
    %816 = vmatprep.subr.mxu0 0.0
    %817 = vmatpush1.msra.mxu0 0.0
    %818 = vmatprep.subr.mxu0 0.0
    %819 = vmatpush1.msra.mxu0 0.0
    %820 = vmatprep.subr.mxu0 0.0
    %821 = vmatpush1.msra.mxu0 0.0
    %822 = vmatprep.subr.mxu0 0.0
    %823 = vmatpush1.msra.mxu0 0.0
    %824 = vmatprep.subr.mxu0 0.0
    %825 = vmatpush1.msra.mxu0 0.0
    %826 = vmatprep.subr.mxu0 0.0
    %827 = vmatpush1.msra.mxu0 0.0
    %828 = vmatprep.subr.mxu0 0.0
    %829 = vmatpush1.msra.mxu0 0.0
    %830 = vmatprep.subr.mxu0 0.0
    %831 = vmatpush1.msra.mxu0 0.0
    %832 = vmatprep.subr.mxu0 0.0
    %833 = vmatpush1.msra.mxu0 0.0
    %834 = vmatprep.subr.mxu0 0.0
    %835 = vmatpush1.msra.mxu0 0.0
    %836 = vmatprep.subr.mxu0 0.0
    %837 = vmatpush1.msra.mxu0 0.0
    %838 = vmatprep.mubr.f32.mxu0 0.0
    %839 = vmatmul.mubr.f32.gmra.mrb[0].mxu0 %v31
    %v840 = vpop.f32.mrb[0].mxu0
    %v841 = vadd.f32 0.0, %v840
    %v842 = vpop.f32.mrb[0].mxu0
    %843 = vmatprep.mubr.f32.mxu0 0.0
    %844 = vmatmul.mubr.f32.gmra.mrb[0].mxu0 %v34
    %v845 = vpop.f32.mrb[0].mxu0
    %v846 = vadd.f32 0.0, %v845
    %v847 = vpop.f32.mrb[0].mxu0
    %848 = vmatprep.mubr.f32.mxu0 0.0
    %849 = vmatmul.mubr.f32.gmra.mrb[0].mxu0 %v37
    %v850 = vpop.f32.mrb[0].mxu0
    %v851 = vadd.f32 0.0, %v850
    %v852 = vpop.f32.mrb[0].mxu0
    %853 = vmatprep.mubr.f32.mxu0 0.0
    %854 = vmatmul.mubr.f32.gmra.mrb[0].mxu0 %v40
    %v855 = vpop.f32.mrb[0].mxu0
    %v856 = vadd.f32 0.0, %v855
    %v857 = vpop.f32.mrb[0].mxu0
    %858 = vmatprep.mubr.f32.mxu0 0.0
    %859 = vmatmul.mubr.f32.gmra.mrb[0].mxu0 %v43
    %v860 = vpop.f32.mrb[0].mxu0
    %v861 = vadd.f32 0.0, %v860
    %v862 = vpop.f32.mrb[0].mxu0
    %863 = vmatprep.mubr.f32.mxu0 0.0
    %864 = vmatmul.mubr.f32.gmra.mrb[0].mxu0 %v46
    %v865 = vpop.f32.mrb[0].mxu0
    %v866 = vadd.f32 0.0, %v865
    %v867 = vpop.f32.mrb[0].mxu0
    %868 = vmatprep.mubr.f32.mxu0 0.0
    %869 = vmatmul.mubr.f32.gmra.mrb[0].mxu0 %v49
    %v870 = vpop.f32.mrb[0].mxu0
    %v871 = vadd.f32 0.0, %v870
    %v872 = vpop.f32.mrb[0].mxu0
    %873 = vmatprep.mubr.f32.mxu0 0.0
    %874 = vmatmul.mubr.f32.gmra.mrb[0].mxu0 %v52
    %v875 = vpop.f32.mrb[0].mxu0
    %v876 = vadd.f32 0.0, %v875
    %v877 = vpop.f32.mrb[0].mxu0
    %878 = vmatprep.mubr.f32.mxu0 0.0
    %879 = vmatmul.mubr.f32.gmra.mrb[0].mxu0 %v55
    %v880 = vpop.f32.mrb[0].mxu0
    %v881 = vadd.f32 0.0, %v880
    %v882 = vpop.f32.mrb[0].mxu0
    %883 = vmatprep.mubr.f32.mxu0 0.0
    %884 = vmatmul.mubr.f32.gmra.mrb[0].mxu0 %v58
    %v885 = vpop.f32.mrb[0].mxu0
    %v886 = vadd.f32 0.0, %v885
    %v887 = vpop.f32.mrb[0].mxu0
    %888 = vmatprep.mubr.f32.mxu0 0.0
    %889 = vmatmul.mubr.f32.gmra.mrb[0].mxu0 %v61
    %v890 = vpop.f32.mrb[0].mxu0
    %v891 = vadd.f32 0.0, %v890
    %v892 = vpop.f32.mrb[0].mxu0
    %893 = vmatprep.mubr.f32.mxu0 0.0
    %894 = vmatmul.mubr.f32.gmra.mrb[0].mxu0 %v64
    %v895 = vpop.f32.mrb[0].mxu0
    %v896 = vadd.f32 0.0, %v895
    %v897 = vpop.f32.mrb[0].mxu0
    %898 = vmatprep.mubr.f32.mxu0 0.0
    %899 = vmatmul.mubr.f32.gmra.mrb[0].mxu0 %v67
    %v900 = vpop.f32.mrb[0].mxu0
    %v901 = vadd.f32 0.0, %v900
    %v902 = vpop.f32.mrb[0].mxu0
    %903 = vmatprep.mubr.f32.mxu0 0.0
    %904 = vmatmul.mubr.f32.gmra.mrb[0].mxu0 %v70
    %v905 = vpop.f32.mrb[0].mxu0
    %v906 = vadd.f32 0.0, %v905
    %v907 = vpop.f32.mrb[0].mxu0
    %908 = vmatprep.mubr.f32.mxu0 0.0
    %909 = vmatmul.mubr.f32.gmra.mrb[0].mxu0 %v73
    %v910 = vpop.f32.mrb[0].mxu0
    %v911 = vadd.f32 0.0, %v910
    %v912 = vpop.f32.mrb[0].mxu0
    %913 = vmatprep.mubr.f32.mxu0 0.0
    %914 = vmatmul.mubr.f32.gmra.mrb[0].mxu0 %v76
    %v915 = vpop.f32.mrb[0].mxu0
    %v916 = vadd.f32 0.0, %v915
    %v917 = vpop.f32.mrb[0].mxu0
    %918 = vdwg.mxu0
    %v919 = vpack.c.bf16 %v846, %v841
    %v920 = vpack.c.bf16 %v856, %v851
    %v921 = vpack.c.bf16 %v866, %v861
    %v922 = vpack.c.bf16 %v876, %v871
    %v923 = vpack.c.bf16 %v886, %v881
    %v924 = vpack.c.bf16 %v896, %v891
    %v925 = vpack.c.bf16 %v906, %v901
    %v926 = vpack.c.bf16 %v916, %v911
    %v935 = vunpack.c.l.b16 %v919
    %v936 = vunpack.c.h.b16 %v919
    %v937 = vunpack.c.l.b16 %v920
    %v938 = vunpack.c.h.b16 %v920
    %v939 = vunpack.c.l.b16 %v921
    %v940 = vunpack.c.h.b16 %v921
    %v941 = vunpack.c.l.b16 %v922
    %v942 = vunpack.c.h.b16 %v922
    %v943 = vunpack.c.l.b16 %v923
    %v944 = vunpack.c.h.b16 %v923
    %v945 = vunpack.c.l.b16 %v924
    %v946 = vunpack.c.h.b16 %v924
    %v947 = vunpack.c.l.b16 %v925
    %v948 = vunpack.c.h.b16 %v925
    %v949 = vunpack.c.l.b16 %v926
    %v950 = vunpack.c.h.b16 %v926
    %v951 = vpack.c.b16 %v935, %v935
    %v952 = vpack.c.b16 %v936, %v936
    %v953 = vpack.c.b16 %v937, %v937
    %v954 = vpack.c.b16 %v938, %v938
    %v955 = vpack.c.b16 %v939, %v939
    %v956 = vpack.c.b16 %v940, %v940
    %v957 = vpack.c.b16 %v941, %v941
    %v958 = vpack.c.b16 %v942, %v942
    %v959 = vpack.c.b16 %v943, %v943
    %v960 = vpack.c.b16 %v944, %v944
    %v961 = vpack.c.b16 %v945, %v945
    %v962 = vpack.c.b16 %v946, %v946
    %v963 = vpack.c.b16 %v947, %v947
    %v964 = vpack.c.b16 %v948, %v948
    %v965 = vpack.c.b16 %v949, %v949
    %v966 = vpack.c.b16 %v950, %v950
    %s983 = scalar_lea.vmem [#allocation2], 192
    %984 = vst [vmem:[%s983] sm:$0xf] %v951
    %985 = vst [vmem:[%s983 + $0x4] sm:$0xf] %v952
    %986 = vst [vmem:[%s983 + $0x8] sm:$0xf] %v953
    %987 = vst [vmem:[%s983 + $0xc] sm:$0xf] %v954
    %988 = vst [vmem:[%s983 + $0x10] sm:$0xf] %v955
    %989 = vst [vmem:[%s983 + $0x14] sm:$0xf] %v956
    %990 = vst [vmem:[%s983 + $0x18] sm:$0xf] %v957
    %991 = vst [vmem:[%s983 + $0x1c] sm:$0xf] %v958
    %992 = vst [vmem:[%s983 + $0x20] sm:$0xf] %v959
    %993 = vst [vmem:[%s983 + $0x24] sm:$0xf] %v960
    %994 = vst [vmem:[%s983 + $0x28] sm:$0xf] %v961
    %995 = vst [vmem:[%s983 + $0x2c] sm:$0xf] %v962
    %996 = vst [vmem:[%s983 + $0x30] sm:$0xf] %v963
    %997 = vst [vmem:[%s983 + $0x34] sm:$0xf] %v964
    %998 = vst [vmem:[%s983 + $0x38] sm:$0xf] %v965
    %999 = vst [vmem:[%s983 + $0x3c] sm:$0xf] %v966
    // Predicated region
    $region10: #{tpu_custom_call.1} parent=1 // pred_check
      _
    $region11: #{tpu_custom_call.1} parent=1 // pred_check_branch
      %1001 = sbr.rel (0) target = $region13
    $region12: #{tpu_custom_call.1} parent=1 // pred_region
      %s1003 = ssub.s32 4096, 4096
      %1004 = vsyncadd [#allocation3], %s1003
      %s1005 = sshll.u32 [#allocation2], 4
      %s1006 = int_to_ptr.vmem [resolvable:$true] %s1005
      %1011 = dma.vmem_to_hbm [thread:$0]  %s1006, 4096, %s2, [#allocation3], 64, 64, 4
    $region13: #{tpu_custom_call.1} parent=1 // pred_fallthru
      _
    // Predicated region
    $region14: #{tpu_custom_call.1} parent=1 // pred_check
      _
    $region15: #{tpu_custom_call.1} parent=1 // pred_check_branch
      %1013 = sbr.rel (0) target = $region17
    $region16: #{tpu_custom_call.1} parent=1 // pred_region
      %1014 = dma.done [#allocation3], 4096
    $region17: #{tpu_custom_call.1} parent=1 // pred_fallthru
      _
    %1015 = vsyncpa [#allocation3], 1

</llo_original>
